<compile_context>
chip_gen: v7x
topology: tpu7x:2x2x1
jax: 0.10.0
libtpu: 0.0.40
codegen_flags: <defaults>
</compile_context>

<pallas_src>
import jax
import jax.numpy as jnp
from jax.experimental import pallas as pl
from jax.experimental.pallas import tpu as pltpu


# ---------------------------------------------------------------------------
# Pass 1: phi / g 1x1 convs with the 2x2 max-pool fused (tiled over M)
# ---------------------------------------------------------------------------
def _pool_proj_kernel(xp_ref, wp_ref, bp_ref, wg_ref, bg_ref, phi_ref, g_ref):
    """xp_ref: (4, C, TM) bf16 window taps; phi_ref/g_ref: (Ci, TM) bf16."""
    wp = wp_ref[...].astype(jnp.bfloat16)                     # (Ci, C)
    wg = wg_ref[...].astype(jnp.bfloat16)
    phi = None
    g = None
    for a in range(4):                                        # unrolled 2x2 taps
        xa = xp_ref[a].astype(jnp.bfloat16)                   # (C, TM)
        pa = jnp.dot(wp, xa, preferred_element_type=jnp.float32)
        ga = jnp.dot(wg, xa, preferred_element_type=jnp.float32)
        phi = pa if phi is None else jnp.maximum(phi, pa)
        g = ga if g is None else jnp.maximum(g, ga)
    # the per-channel bias commutes with the max-pool
    phi_ref[...] = (phi + bp_ref[...].astype(jnp.float32)).astype(phi_ref.dtype)
    g_ref[...] = (g + bg_ref[...].astype(jnp.float32)).astype(g_ref.dtype)


# ---------------------------------------------------------------------------
# Pass 2: theta projection + attention + output 1x1 conv (BN folded) + residual
# ---------------------------------------------------------------------------
def _attn_kernel(x_ref, phi_t_ref, g_ref, wt_ref, bt_ref, wo_ref, bo_ref, o_ref):
    """x_ref: (C, TQ); phi_t_ref: (M, Ci) bf16; g_ref: (Ci, M) bf16; o_ref: (C, TQ)."""
    x = x_ref[...]                                            # (C, TQ)
    xb = x.astype(jnp.bfloat16)

    # theta = Wt @ x : bf16 MXU operands, f32 accumulation
    theta = jnp.dot(wt_ref[...].astype(jnp.bfloat16), xb,
                    preferred_element_type=jnp.float32)
    theta = theta + bt_ref[...].astype(jnp.float32)           # (Ci, TQ) f32

    # scores s[k, q] = sum_c phi[c, k] * theta[c, q] -> (M, TQ); phi arrives
    # pre-transposed as (M, Ci) so this (and every other) matmul is in the
    # standard no-transpose MXU orientation.
    # TODO(synk): for very large images tile M with an online (flash-style)
    # softmax so the (M, TQ) fp32 score tile stays bounded on v7x.
    s = jnp.dot(phi_t_ref[...], theta.astype(jnp.bfloat16),
                preferred_element_type=jnp.float32)           # (M, TQ)
    s = s - jnp.max(s, axis=0, keepdims=True)                 # sublane-dir reduce
    p = jnp.exp(s)                                            # (M, TQ) f32
    denom = jnp.sum(p, axis=0, keepdims=True)                 # (1, TQ)

    # y[c, q] = sum_k g[c, k] * softmax[k, q] ; normalization deferred
    y = jnp.dot(g_ref[...], p.astype(jnp.bfloat16),
                preferred_element_type=jnp.float32)           # (Ci, TQ)
    y = y * pl.reciprocal(denom, approx=True)

    # output 1x1 conv (BN folded into wo/bo) + residual
    z = jnp.dot(wo_ref[...].astype(jnp.bfloat16), y.astype(jnp.bfloat16),
                preferred_element_type=jnp.float32)
    z = z + bo_ref[...].astype(jnp.float32) + x.astype(jnp.float32)
    o_ref[...] = z.astype(o_ref.dtype)


# ---------------------------------------------------------------------------
# Tiling / VMEM heuristics
# ---------------------------------------------------------------------------
def _pick_tq(n, m):
    """Lane-dense query tile: 512/256/128 only (no 384: v6e/v7x MXU is 256x256),
    capped so the (M, TQ) fp32 score/prob tiles stay <= ~8 MiB, preferring >=2
    pipeline steps per batch element."""
    cands = [t for t in (512, 256, 128)
             if n % t == 0 and t * m * 4 <= 8 * 1024 * 1024]
    for t in cands:
        if n // t >= 2:
            return t
    if cands:
        return cands[0]
    for t in (512, 256, 128):
        if n % t == 0:
            return t
    return n


def _pick_tm(m):
    for t in (512, 256, 128):
        if m % t == 0:
            return t
    return m


def _vmem_limit_bytes():
    """96 MiB scoped window on 128 MiB parts (v5e/v6e); conservative 32 MiB on
    64 MiB parts (v7x) or if the hardware query fails."""
    try:
        cap = int(getattr(pltpu.get_tpu_info(), "vmem_capacity_bytes", 0))
    except Exception:
        cap = 0
    if cap >= 128 * 1024 * 1024:
        return 96 * 1024 * 1024
    return 32 * 1024 * 1024


# ---------------------------------------------------------------------------
# Wrapper
# ---------------------------------------------------------------------------
def nonlocal_block(x_nchw, wt, bt, wp, bp, wg, bg, w_eff, b_eff):
    """Fused non-local block.

    Parameter layout matches the torch module's 1x1 convs: w* is (Cin, Cout),
    b* is (1, Cout); w_eff/b_eff are the BN-folded output conv.
    """
    B, C, H, W = x_nchw.shape
    assert H % 2 == 0 and W % 2 == 0, "sub_sample=True requires even H and W"
    N = H * W
    M = (H // 2) * (W // 2)
    Ci = wt.shape[1]
    TQ = _pick_tq(N, M)
    TM = _pick_tm(M)
    nq, nm = N // TQ, M // TM
    vmem_limit = _vmem_limit_bytes()

    # channels-first sequence layout: a pure reshape, no HBM transpose -> all
    # kernel outputs are lane-dense over the long N axis.
    x_cn = x_nchw.reshape(B, C, N)

    # the four 2x2-window taps of x, gathered once and stored in bf16 (half the
    # extra HBM traffic of an fp32 gather); the pool itself is fused into the
    # projection kernel as a max over the taps AFTER the 1x1 convs.
    # TODO(synk): fold this gather into the projection kernel (strided taps on
    # x_cn) to remove the extra x-sized HBM pass entirely.
    x_taps = (x_nchw.reshape(B, C, H // 2, 2, W // 2, 2)
              .transpose(0, 3, 5, 1, 2, 4)
              .reshape(B, 4, C, M)
              .astype(jnp.bfloat16))

    # channels-first weights / column biases (tiny host-side transposes)
    wt_t, wp_t, wg_t = wt.T, wp.T, wg.T           # (Ci, C)
    wo_t = w_eff.T                                # (C, Ci)
    bt_c, bp_c, bg_c = bt.reshape(Ci, 1), bp.reshape(Ci, 1), bg.reshape(Ci, 1)
    bo_c = b_eff.reshape(C, 1)

    def const_spec(shape):
        return pl.BlockSpec(shape, lambda b, i: (0,) * len(shape))

    # ---- pass 1: pooled phi / g, tiled over M (only a (4, C, TM) tap tile is
    # ever resident; outputs kept in bf16) -----------------------------------
    phi, g = pl.pallas_call(
        _pool_proj_kernel,
        grid=(B, nm),
        in_specs=[
            pl.BlockSpec((None, 4, C, TM), lambda b, m: (b, 0, 0, m)),
            const_spec((Ci, C)), const_spec((Ci, 1)),          # phi weights
            const_spec((Ci, C)), const_spec((Ci, 1)),          # g weights
        ],
        out_specs=[
            pl.BlockSpec((None, Ci, TM), lambda b, m: (b, 0, m)),
            pl.BlockSpec((None, Ci, TM), lambda b, m: (b, 0, m)),
        ],
        out_shape=(jax.ShapeDtypeStruct((B, Ci, M), jnp.bfloat16),
                   jax.ShapeDtypeStruct((B, Ci, M), jnp.bfloat16)),
        compiler_params=pltpu.CompilerParams(
            dimension_semantics=("parallel", "parallel"),
            vmem_limit_bytes=vmem_limit),
    )(x_taps, wp_t, bp_c, wg_t, bg_c)

    # tiny bf16 transpose so the score matmul in pass 2 is standard-orientation
    phi_t = jnp.swapaxes(phi, 1, 2)               # (B, M, Ci)

    # ---- pass 2: attention + output conv (BN folded) + residual -------------
    z_cn = pl.pallas_call(
        _attn_kernel,
        grid=(B, nq),
        in_specs=[
            pl.BlockSpec((None, C, TQ), lambda b, q: (b, 0, q)),      # x tile
            pl.BlockSpec((None, M, Ci), lambda b, q: (b, 0, 0)),      # phi^T
            pl.BlockSpec((None, Ci, M), lambda b, q: (b, 0, 0)),      # g
            const_spec((Ci, C)), const_spec((Ci, 1)),                 # theta
            const_spec((C, Ci)), const_spec((C, 1)),                  # W (BN folded)
        ],
        out_specs=pl.BlockSpec((None, C, TQ), lambda b, q: (b, 0, q)),
        out_shape=jax.ShapeDtypeStruct((B, C, N), x_nchw.dtype),
        compiler_params=pltpu.CompilerParams(
            dimension_semantics=("parallel", "parallel"),
            vmem_limit_bytes=vmem_limit),
    )(x_cn, phi_t, g, wt_t, bt_c, wo_t, bo_c)

    return z_cn.reshape(B, C, H, W)


# ---------------------------------------------------------------------------
# Pure-JAX reference (mirrors the torch forward in NCHW layout)
# ---------------------------------------------------------------------------
def reference(x, wt, bt, wp, bp, wg, bg, w_eff, b_eff):
    B, C, H, W = x.shape
    Ci = wt.shape[1]

    def conv1x1(inp, w, b):            # (B,Cin,H,W) @ (Cin,Cout) -> (B,Cout,H,W)
        return jnp.einsum('bchw,ck->bkhw', inp, w) + b[0][None, :, None, None]

    def pool(inp):                     # MaxPool2d(2,2) on NCHW
        b_, c_, h_, w_ = inp.shape
        return inp.reshape(b_, c_, h_ // 2, 2, w_ // 2, 2).max(axis=(3, 5))

    theta_x = conv1x1(x, wt, bt).reshape(B, Ci, -1).transpose(0, 2, 1)   # (B,N,Ci)
    phi_x = pool(conv1x1(x, wp, bp)).reshape(B, Ci, -1)                  # (B,Ci,M)
    g_x = pool(conv1x1(x, wg, bg)).reshape(B, Ci, -1).transpose(0, 2, 1) # (B,M,Ci)

    f = jnp.einsum('bnc,bcm->bnm', theta_x, phi_x)
    f_div_C = jax.nn.softmax(f, axis=-1)
    y = jnp.einsum('bnm,bmc->bnc', f_div_C, g_x)                         # (B,N,Ci)
    y = y.transpose(0, 2, 1).reshape(B, Ci, H, W)
    W_y = conv1x1(y, w_eff, b_eff)
    return W_y + x


# ---------------------------------------------------------------------------
if __name__ == "__main__":
    key = jax.random.PRNGKey(0)
    B, C, H, W = 2, 4, 16, 16
    Ci = max(C // 2, 1)

    keys = jax.random.split(key, 13)
    x = jax.random.normal(keys[0], (B, C, H, W), jnp.float32)

    def conv_params(kw, kb, cin, cout):
        # torch weight is (Cout, Cin, 1, 1); stored here as (Cin, Cout)
        w = jax.random.normal(kw, (cin, cout), jnp.float32) * 0.2
        b = jax.random.normal(kb, (1, cout), jnp.float32) * 0.1
        return w, b

    wt, bt = conv_params(keys[1], keys[2], C, Ci)     # theta
    wp, bp = conv_params(keys[3], keys[4], C, Ci)     # phi
    wg, bg = conv_params(keys[5], keys[6], C, Ci)     # g
    wW, bW = conv_params(keys[7], keys[8], Ci, C)     # W (conv part)

    # BatchNorm2d(C) params, eval mode, folded into the W conv.
    gamma = jax.random.normal(keys[9], (C,), jnp.float32) * 0.5 + 1.0
    beta = jax.random.normal(keys[10], (C,), jnp.float32) * 0.1
    run_mean = jax.random.normal(keys[11], (C,), jnp.float32) * 0.1
    run_var = jnp.abs(jax.random.normal(keys[12], (C,), jnp.float32)) + 0.5
    eps = 1e-5
    scale = gamma / jnp.sqrt(run_var + eps)
    w_eff = wW * scale[None, :]
    b_eff = ((bW[0] - run_mean) * scale + beta)[None, :]

    z = nonlocal_block(x, wt, bt, wp, bp, wg, bg, w_eff, b_eff)
    z = jax.block_until_ready(z)

    z_ref = reference(x, wt, bt, wp, bp, wg, bg, w_eff, b_eff)
    assert z.shape == (B, C, H, W)
    # bf16 MXU operands (fp32 accumulation) -> loosened tolerance vs fp32 ref
    assert jnp.allclose(z, z_ref, rtol=3e-2, atol=3e-2), (
        float(jnp.max(jnp.abs(z - z_ref))))

    print("KERNEL_OK")
</pallas_src>

<mosaic_0001>
module attributes {stable_mosaic.version = 11 : i64} {
  func.func @_pool_proj_kernel(%arg0: i32, %arg1: i32, %arg2: memref<1x4x4x64xbf16, #tpu.memory_space<vmem>>, %arg3: memref<2x4xf32, #tpu.memory_space<vmem>>, %arg4: memref<2x1xf32, #tpu.memory_space<vmem>>, %arg5: memref<2x4xf32, #tpu.memory_space<vmem>>, %arg6: memref<2x1xf32, #tpu.memory_space<vmem>>, %arg7: memref<1x2x64xbf16, #tpu.memory_space<vmem>>, %arg8: memref<1x2x64xbf16, #tpu.memory_space<vmem>>) attributes {dimension_semantics = [#tpu.dimension_semantics<parallel>, #tpu.dimension_semantics<parallel>], iteration_bounds = array<i64: 2, 1>, scalar_prefetch = 0 : i64, scratch_operands = 0 : i64, tpu.core_type = #tpu.core_type<tc>, window_params = [{transform_indices = @transform_0, window_bounds = array<i64: 1, 4, 4, 64>}, {pipeline_mode = #tpu.pipeline_mode<synchronous>, transform_indices = @transform_1, window_bounds = array<i64: 2, 4>}, {pipeline_mode = #tpu.pipeline_mode<synchronous>, transform_indices = @transform_2, window_bounds = array<i64: 2, 1>}, {pipeline_mode = #tpu.pipeline_mode<synchronous>, transform_indices = @transform_3, window_bounds = array<i64: 2, 4>}, {pipeline_mode = #tpu.pipeline_mode<synchronous>, transform_indices = @transform_4, window_bounds = array<i64: 2, 1>}, {transform_indices = @transform_5, window_bounds = array<i64: 1, 2, 64>}, {transform_indices = @transform_6, window_bounds = array<i64: 1, 2, 64>}]} {
    %c0 = arith.constant 0 : index
    %c0_0 = arith.constant 0 : index
    %0 = vector.load %arg3[%c0, %c0_0] : memref<2x4xf32, #tpu.memory_space<vmem>>, vector<2x4xf32>
    %1 = arith.truncf %0 : vector<2x4xf32> to vector<2x4xbf16>
    %c0_1 = arith.constant 0 : index
    %c0_2 = arith.constant 0 : index
    %2 = vector.load %arg5[%c0_1, %c0_2] : memref<2x4xf32, #tpu.memory_space<vmem>>, vector<2x4xf32>
    %3 = arith.truncf %2 : vector<2x4xf32> to vector<2x4xbf16>
    %c0_3 = arith.constant 0 : index
    %c0_4 = arith.constant 0 : index
    %c0_5 = arith.constant 0 : index
    %c0_6 = arith.constant 0 : index
    %4 = vector.load %arg2[%c0_3, %c0_4, %c0_5, %c0_6] : memref<1x4x4x64xbf16, #tpu.memory_space<vmem>>, vector<1x1x4x64xbf16>
    %5 = vector.shape_cast %4 : vector<1x1x4x64xbf16> to vector<4x64xbf16>
    %cst = arith.constant dense<0.000000e+00> : vector<2x64xf32>
    %6 = tpu.matmul %1, %5, %cst {dimension_numbers = #tpu.dot_dimension_numbers<[1], [0], [0], [1], [0, 0, 1, 1], [], []>} : vector<2x4xbf16>, vector<4x64xbf16>, vector<2x64xf32> -> vector<2x64xf32>
    %cst_7 = arith.constant dense<0.000000e+00> : vector<2x64xf32>
    %7 = tpu.matmul %3, %5, %cst_7 {dimension_numbers = #tpu.dot_dimension_numbers<[1], [0], [0], [1], [0, 0, 1, 1], [], []>} : vector<2x4xbf16>, vector<4x64xbf16>, vector<2x64xf32> -> vector<2x64xf32>
    %c0_8 = arith.constant 0 : index
    %c1 = arith.constant 1 : index
    %c0_9 = arith.constant 0 : index
    %c0_10 = arith.constant 0 : index
    %8 = vector.load %arg2[%c0_8, %c1, %c0_9, %c0_10] : memref<1x4x4x64xbf16, #tpu.memory_space<vmem>>, vector<1x1x4x64xbf16>
    %9 = vector.shape_cast %8 : vector<1x1x4x64xbf16> to vector<4x64xbf16>
    %cst_11 = arith.constant dense<0.000000e+00> : vector<2x64xf32>
    %10 = tpu.matmul %1, %9, %cst_11 {dimension_numbers = #tpu.dot_dimension_numbers<[1], [0], [0], [1], [0, 0, 1, 1], [], []>} : vector<2x4xbf16>, vector<4x64xbf16>, vector<2x64xf32> -> vector<2x64xf32>
    %cst_12 = arith.constant dense<0.000000e+00> : vector<2x64xf32>
    %11 = tpu.matmul %3, %9, %cst_12 {dimension_numbers = #tpu.dot_dimension_numbers<[1], [0], [0], [1], [0, 0, 1, 1], [], []>} : vector<2x4xbf16>, vector<4x64xbf16>, vector<2x64xf32> -> vector<2x64xf32>
    %12 = arith.maximumf %6, %10 : vector<2x64xf32>
    %13 = arith.maximumf %7, %11 : vector<2x64xf32>
    %c0_13 = arith.constant 0 : index
    %c2 = arith.constant 2 : index
    %c0_14 = arith.constant 0 : index
    %c0_15 = arith.constant 0 : index
    %14 = vector.load %arg2[%c0_13, %c2, %c0_14, %c0_15] : memref<1x4x4x64xbf16, #tpu.memory_space<vmem>>, vector<1x1x4x64xbf16>
    %15 = vector.shape_cast %14 : vector<1x1x4x64xbf16> to vector<4x64xbf16>
    %cst_16 = arith.constant dense<0.000000e+00> : vector<2x64xf32>
    %16 = tpu.matmul %1, %15, %cst_16 {dimension_numbers = #tpu.dot_dimension_numbers<[1], [0], [0], [1], [0, 0, 1, 1], [], []>} : vector<2x4xbf16>, vector<4x64xbf16>, vector<2x64xf32> -> vector<2x64xf32>
    %cst_17 = arith.constant dense<0.000000e+00> : vector<2x64xf32>
    %17 = tpu.matmul %3, %15, %cst_17 {dimension_numbers = #tpu.dot_dimension_numbers<[1], [0], [0], [1], [0, 0, 1, 1], [], []>} : vector<2x4xbf16>, vector<4x64xbf16>, vector<2x64xf32> -> vector<2x64xf32>
    %18 = arith.maximumf %12, %16 : vector<2x64xf32>
    %19 = arith.maximumf %13, %17 : vector<2x64xf32>
    %c0_18 = arith.constant 0 : index
    %c3 = arith.constant 3 : index
    %c0_19 = arith.constant 0 : index
    %c0_20 = arith.constant 0 : index
    %20 = vector.load %arg2[%c0_18, %c3, %c0_19, %c0_20] : memref<1x4x4x64xbf16, #tpu.memory_space<vmem>>, vector<1x1x4x64xbf16>
    %21 = vector.shape_cast %20 : vector<1x1x4x64xbf16> to vector<4x64xbf16>
    %cst_21 = arith.constant dense<0.000000e+00> : vector<2x64xf32>
    %22 = tpu.matmul %1, %21, %cst_21 {dimension_numbers = #tpu.dot_dimension_numbers<[1], [0], [0], [1], [0, 0, 1, 1], [], []>} : vector<2x4xbf16>, vector<4x64xbf16>, vector<2x64xf32> -> vector<2x64xf32>
    %cst_22 = arith.constant dense<0.000000e+00> : vector<2x64xf32>
    %23 = tpu.matmul %3, %21, %cst_22 {dimension_numbers = #tpu.dot_dimension_numbers<[1], [0], [0], [1], [0, 0, 1, 1], [], []>} : vector<2x4xbf16>, vector<4x64xbf16>, vector<2x64xf32> -> vector<2x64xf32>
    %24 = arith.maximumf %18, %22 : vector<2x64xf32>
    %25 = arith.maximumf %19, %23 : vector<2x64xf32>
    %c0_23 = arith.constant 0 : index
    %c0_24 = arith.constant 0 : index
    %26 = vector.load %arg4[%c0_23, %c0_24] : memref<2x1xf32, #tpu.memory_space<vmem>>, vector<2x1xf32>
    %27 = vector.broadcast %26 : vector<2x1xf32> to vector<2x64xf32>
    %28 = arith.addf %24, %27 : vector<2x64xf32>
    %29 = arith.truncf %28 : vector<2x64xf32> to vector<2x64xbf16>
    %c0_25 = arith.constant 0 : index
    %c0_26 = arith.constant 0 : index
    %c0_27 = arith.constant 0 : index
    %30 = vector.load %arg7[%c0_25, %c0_26, %c0_27] : memref<1x2x64xbf16, #tpu.memory_space<vmem>>, vector<1x2x64xbf16>
    %31 = vector.shape_cast %30 : vector<1x2x64xbf16> to vector<2x64xbf16>
    %32 = vector.shape_cast %29 : vector<2x64xbf16> to vector<1x2x64xbf16>
    tpu.vector_store %arg7[%c0_25, %c0_26, %c0_27], %32 {strides = array<i32>} : memref<1x2x64xbf16, #tpu.memory_space<vmem>>, vector<1x2x64xbf16>,
    %c0_28 = arith.constant 0 : index
    %c0_29 = arith.constant 0 : index
    %33 = vector.load %arg6[%c0_28, %c0_29] : memref<2x1xf32, #tpu.memory_space<vmem>>, vector<2x1xf32>
    %34 = vector.broadcast %33 : vector<2x1xf32> to vector<2x64xf32>
    %35 = arith.addf %25, %34 : vector<2x64xf32>
    %36 = arith.truncf %35 : vector<2x64xf32> to vector<2x64xbf16>
    %c0_30 = arith.constant 0 : index
    %c0_31 = arith.constant 0 : index
    %c0_32 = arith.constant 0 : index
    %37 = vector.load %arg8[%c0_30, %c0_31, %c0_32] : memref<1x2x64xbf16, #tpu.memory_space<vmem>>, vector<1x2x64xbf16>
    %38 = vector.shape_cast %37 : vector<1x2x64xbf16> to vector<2x64xbf16>
    %39 = vector.shape_cast %36 : vector<2x64xbf16> to vector<1x2x64xbf16>
    tpu.vector_store %arg8[%c0_30, %c0_31, %c0_32], %39 {strides = array<i32>} : memref<1x2x64xbf16, #tpu.memory_space<vmem>>, vector<1x2x64xbf16>,
    return
  }
  func.func @transform_0(%arg0: i32, %arg1: i32) -> (i32, i32, i32, i32) {
    %c0_i32 = arith.constant 0 : i32
    %c0_i32_0 = arith.constant 0 : i32
    %c0_i32_1 = arith.constant 0 : i32
    return %arg0, %c0_i32, %c0_i32_0, %arg1 : i32, i32, i32, i32
  }
  func.func @transform_1(%arg0: i32, %arg1: i32) -> (i32, i32) {
    %c0_i32 = arith.constant 0 : i32
    %c0_i32_0 = arith.constant 0 : i32
    %c0_i32_1 = arith.constant 0 : i32
    return %c0_i32, %c0_i32_0 : i32, i32
  }
  func.func @transform_2(%arg0: i32, %arg1: i32) -> (i32, i32) {
    %c0_i32 = arith.constant 0 : i32
    %c0_i32_0 = arith.constant 0 : i32
    %c0_i32_1 = arith.constant 0 : i32
    return %c0_i32, %c0_i32_0 : i32, i32
  }
  func.func @transform_3(%arg0: i32, %arg1: i32) -> (i32, i32) {
    %c0_i32 = arith.constant 0 : i32
    %c0_i32_0 = arith.constant 0 : i32
    %c0_i32_1 = arith.constant 0 : i32
    return %c0_i32, %c0_i32_0 : i32, i32
  }
  func.func @transform_4(%arg0: i32, %arg1: i32) -> (i32, i32) {
    %c0_i32 = arith.constant 0 : i32
    %c0_i32_0 = arith.constant 0 : i32
    %c0_i32_1 = arith.constant 0 : i32
    return %c0_i32, %c0_i32_0 : i32, i32
  }
  func.func @transform_5(%arg0: i32, %arg1: i32) -> (i32, i32, i32) {
    %c0_i32 = arith.constant 0 : i32
    %c0_i32_0 = arith.constant 0 : i32
    return %arg0, %c0_i32, %arg1 : i32, i32, i32
  }
  func.func @transform_6(%arg0: i32, %arg1: i32) -> (i32, i32, i32) {
    %c0_i32 = arith.constant 0 : i32
    %c0_i32_0 = arith.constant 0 : i32
    return %arg0, %c0_i32, %arg1 : i32, i32, i32
  }
}

</mosaic_0001>

<llo_original>
// kernel: tpu_custom_call.1
$region0: #{tpu_custom_call.1}
  #allocation0 [shape = 'u32[]', space=smem, size = 0x4, offset = 0x4, fixed_abs, tag = 'smem constant byte address 0x4 - core index']
  #allocation1 [shape = 'u32[144,128]{1,0:T(1,128)}', space=vmem, size = 0x12000, scoped, tag = 'internal scratch']
  %s0 = inlined_call_operand.hbm [shape: bf16[2,4,4,64], index: 0, kind: input, shape index: {}]
  %s1 = inlined_call_operand.vmem [shape: f32[2,4], index: 1, kind: input, shape index: {}]
  %s2 = inlined_call_operand.vmem [shape: f32[2,1], index: 2, kind: input, shape index: {}]
  %s3 = inlined_call_operand.vmem [shape: f32[2,4], index: 3, kind: input, shape index: {}]
  %s4 = inlined_call_operand.vmem [shape: f32[2,1], index: 4, kind: input, shape index: {}]
  %s5 = inlined_call_operand.hbm [shape: bf16[2,2,64], index: 5, kind: output, shape index: {0}]
  %s6 = inlined_call_operand.hbm [shape: bf16[2,2,64], index: 6, kind: output, shape index: {1}]
  %7 = xla_tuple %s5, %s6
  %s8 = sld [smem:[#allocation0]]
  $region65: #{tpu_custom_call.1} parent=0
    _
  %s10 = ssub.s32 1, %s8
  %s11 = scalar_select 0, %s10, %s8
  $region1: #{tpu_custom_call.1} parent=0
    #allocation2 [shape = 'u8[8192]{0}', space=vmem, size = 0x2000, scoped, tag = 'input window, operand 0']
    #allocation3 [shape = 's32[2]{0}', space=sflag, size = 0x8, scoped, tag = 'scoped memory for tpu_custom_call.1']
    #allocation4 [shape = 's32[2]{0}', space=sflag, size = 0x8, scoped, tag = 'scoped memory for tpu_custom_call.1']
    #allocation5 [shape = 'u8[1024]{0}', space=vmem, size = 0x400, scoped, tag = 'output window, operand 0']
    #allocation6 [shape = 'u8[1024]{0}', space=vmem, size = 0x400, scoped, tag = 'output window, operand 1']
    #allocation7 [shape = 's32[2]{0}', space=sflag, size = 0x8, scoped, tag = 'scoped memory for tpu_custom_call.1']
    %12 = vsyncpa [#allocation3], 0
    %s13 = scalar_lea.sflag [#allocation3], 1
    %14 = vsyncpa %s13, 0
    %15 = vsyncpa [#allocation4], 0
    %s16 = scalar_lea.sflag [#allocation4], 1
    %17 = vsyncpa %s16, 0
    %18 = vsyncpa [#allocation7], 0
    %s19 = scalar_lea.sflag [#allocation7], 1
    %20 = vsyncpa %s19, 0
    loop: start=0, step=1, limit=4
    $region2: #{tpu_custom_call.1} parent=1 // loop_pre_header
      _
    $region3: #{tpu_custom_call.1} parent=1 // loop_header
      %s22 = sphi 0, %s26
      %p23 = scmp.ge.s32.totalorder %s22, 4
      %s29 = sphi 0, %s41
      %s30 = sphi 0, %s37
      %s31 = sphi 0, %s29
      %s32 = sphi 0, %s30
      %s33 = sphi 0, %s31
      %s34 = sphi 0, %s32
      %s46 = sphi 0, %s48
      %s49 = sphi 0, %s46
      %s50 = sphi 0, %s49
      %s66 = sphi 0, %s50
      %s70 = sphi 0, %s70
      %s72 = sphi 0, %s70
      %s73 = sphi 0, %s72
      %s87 = sphi 0, %s73
      %s91 = sphi 0, %s91
      %s93 = sphi 0, %s91
      %s94 = sphi 0, %s93
      %s108 = sphi 0, %s94
      %s112 = sphi 0, %s112
      %s114 = sphi 0, %s112
      %s115 = sphi 0, %s114
      %s129 = sphi 0, %s115
      %s133 = sphi 0, %s133
      %s135 = sphi 0, %s133
      %s136 = sphi 0, %s135
      %s150 = sphi 0, %s136
      %s158 = sphi 0, %s160
      %s161 = sphi 0, %s158
      %s162 = sphi 0, %s161
      %s178 = sphi 0, %s162
      %s186 = sphi 0, %s188
      %s189 = sphi 0, %s186
      %s190 = sphi 0, %s189
      %s206 = sphi 0, %s190
    $region4: #{tpu_custom_call.1} parent=1 // loop_header_branch
      %25 = sbr.rel (%p23) target = $region8
    $region5: #{tpu_custom_call.1} parent=1 // loop_body
      %s27 = ssub.s32 %s22, 1
      %s28 = ssub.s32 %s22, 2
      %s35 = sadd.s32 1, %s30
      %p36 = scmp.ge.s32.totalorder %s35, 1
      %s37 = scalar_select %p36, 0, %s35
      %s38 = sadd.s32 1, %s29
      %s39 = scalar_select %p36, %s38, %s29
      %p40 = scmp.ge.s32.totalorder %s39, 2
      %s41 = scalar_select %p40, 0, %s39
      %s42 = ssub.s32 %s29, %s41
      %s43 = ssub.s32 %s30, %s37
      %s44 = sor.u32 %s42, %s43
      %p45 = scmp.eq.s32.totalorder %s44, 0
      %s47 = sadd.s32 %s46, 1
      %s48 = scalar_select %p45, %s46, %s47
      %p51 = pneg %p45
      %p52 = scmp.eq.s32.totalorder %s22, 1
      %p53 = por %p51, %p52
      %p54 = scmp.ne.s32.totalorder %s46, %s49
      %p55 = scmp.eq.s32.totalorder %s22, 0
      %p56 = por %p54, %p55
      %p57 = scmp.ne.s32.totalorder %s46, %s49
      %p58 = scmp.eq.s32.totalorder %s27, 1
      %p59 = por %p57, %p58
      %p60 = scmp.ne.s32.totalorder %s49, %s50
      %p61 = scmp.eq.s32.totalorder %s27, 0
      %p62 = por %p60, %p61
      %p63 = scmp.ne.s32.totalorder %s49, %s50
      %p64 = scmp.eq.s32.totalorder %s28, 1
      %p65 = por %p63, %p64
      %p67 = scmp.ne.s32.totalorder %s50, %s66
      %p68 = scmp.eq.s32.totalorder %s28, 0
      %p69 = por %p67, %p68
      %s71 = sadd.s32 %s70, 1
      %p74 = scmp.eq.s32.totalorder %s22, 1
      %p75 = scmp.ne.s32.totalorder %s70, %s72
      %p76 = scmp.eq.s32.totalorder %s22, 0
      %p77 = por %p75, %p76
      %p78 = scmp.ne.s32.totalorder %s70, %s72
      %p79 = scmp.eq.s32.totalorder %s27, 1
      %p80 = por %p78, %p79
      %p81 = scmp.ne.s32.totalorder %s72, %s73
      %p82 = scmp.eq.s32.totalorder %s27, 0
      %p83 = por %p81, %p82
      %p84 = scmp.ne.s32.totalorder %s72, %s73
      %p85 = scmp.eq.s32.totalorder %s28, 1
      %p86 = por %p84, %p85
      %p88 = scmp.ne.s32.totalorder %s73, %s87
      %p89 = scmp.eq.s32.totalorder %s28, 0
      %p90 = por %p88, %p89
      %s92 = sadd.s32 %s91, 1
      %p95 = scmp.eq.s32.totalorder %s22, 1
      %p96 = scmp.ne.s32.totalorder %s91, %s93
      %p97 = scmp.eq.s32.totalorder %s22, 0
      %p98 = por %p96, %p97
      %p99 = scmp.ne.s32.totalorder %s91, %s93
      %p100 = scmp.eq.s32.totalorder %s27, 1
      %p101 = por %p99, %p100
      %p102 = scmp.ne.s32.totalorder %s93, %s94
      %p103 = scmp.eq.s32.totalorder %s27, 0
      %p104 = por %p102, %p103
      %p105 = scmp.ne.s32.totalorder %s93, %s94
      %p106 = scmp.eq.s32.totalorder %s28, 1
      %p107 = por %p105, %p106
      %p109 = scmp.ne.s32.totalorder %s94, %s108
      %p110 = scmp.eq.s32.totalorder %s28, 0
      %p111 = por %p109, %p110
      %s113 = sadd.s32 %s112, 1
      %p116 = scmp.eq.s32.totalorder %s22, 1
      %p117 = scmp.ne.s32.totalorder %s112, %s114
      %p118 = scmp.eq.s32.totalorder %s22, 0
      %p119 = por %p117, %p118
      %p120 = scmp.ne.s32.totalorder %s112, %s114
      %p121 = scmp.eq.s32.totalorder %s27, 1
      %p122 = por %p120, %p121
      %p123 = scmp.ne.s32.totalorder %s114, %s115
      %p124 = scmp.eq.s32.totalorder %s27, 0
      %p125 = por %p123, %p124
      %p126 = scmp.ne.s32.totalorder %s114, %s115
      %p127 = scmp.eq.s32.totalorder %s28, 1
      %p128 = por %p126, %p127
      %p130 = scmp.ne.s32.totalorder %s115, %s129
      %p131 = scmp.eq.s32.totalorder %s28, 0
      %p132 = por %p130, %p131
      %s134 = sadd.s32 %s133, 1
      %p137 = scmp.eq.s32.totalorder %s22, 1
      %p138 = scmp.ne.s32.totalorder %s133, %s135
      %p139 = scmp.eq.s32.totalorder %s22, 0
      %p140 = por %p138, %p139
      %p141 = scmp.ne.s32.totalorder %s133, %s135
      %p142 = scmp.eq.s32.totalorder %s27, 1
      %p143 = por %p141, %p142
      %p144 = scmp.ne.s32.totalorder %s135, %s136
      %p145 = scmp.eq.s32.totalorder %s27, 0
      %p146 = por %p144, %p145
      %p147 = scmp.ne.s32.totalorder %s135, %s136
      %p148 = scmp.eq.s32.totalorder %s28, 1
      %p149 = por %p147, %p148
      %p151 = scmp.ne.s32.totalorder %s136, %s150
      %p152 = scmp.eq.s32.totalorder %s28, 0
      %p153 = por %p151, %p152
      %s154 = ssub.s32 %s29, %s41
      %s155 = ssub.s32 %s30, %s37
      %s156 = sor.u32 %s154, %s155
      %p157 = scmp.eq.s32.totalorder %s156, 0
      %s159 = sadd.s32 %s158, 1
      %s160 = scalar_select %p157, %s158, %s159
      %p163 = pneg %p157
      %p164 = scmp.eq.s32.totalorder %s22, 1
      %p165 = por %p163, %p164
      %p166 = scmp.ne.s32.totalorder %s158, %s161
      %p167 = scmp.eq.s32.totalorder %s22, 0
      %p168 = por %p166, %p167
      %p169 = scmp.ne.s32.totalorder %s158, %s161
      %p170 = scmp.eq.s32.totalorder %s27, 1
      %p171 = por %p169, %p170
      %p172 = scmp.ne.s32.totalorder %s161, %s162
      %p173 = scmp.eq.s32.totalorder %s27, 0
      %p174 = por %p172, %p173
      %p175 = scmp.ne.s32.totalorder %s161, %s162
      %p176 = scmp.eq.s32.totalorder %s28, 1
      %p177 = por %p175, %p176
      %p179 = scmp.ne.s32.totalorder %s162, %s178
      %p180 = scmp.eq.s32.totalorder %s28, 0
      %p181 = por %p179, %p180
      %s182 = ssub.s32 %s29, %s41
      %s183 = ssub.s32 %s30, %s37
      %s184 = sor.u32 %s182, %s183
      %p185 = scmp.eq.s32.totalorder %s184, 0
      %s187 = sadd.s32 %s186, 1
      %s188 = scalar_select %p185, %s186, %s187
      %p191 = pneg %p185
      %p192 = scmp.eq.s32.totalorder %s22, 1
      %p193 = por %p191, %p192
      %p194 = scmp.ne.s32.totalorder %s186, %s189
      %p195 = scmp.eq.s32.totalorder %s22, 0
      %p196 = por %p194, %p195
      %p197 = scmp.ne.s32.totalorder %s186, %s189
      %p198 = scmp.eq.s32.totalorder %s27, 1
      %p199 = por %p197, %p198
      %p200 = scmp.ne.s32.totalorder %s189, %s190
      %p201 = scmp.eq.s32.totalorder %s27, 0
      %p202 = por %p200, %p201
      %p203 = scmp.ne.s32.totalorder %s189, %s190
      %p204 = scmp.eq.s32.totalorder %s28, 1
      %p205 = por %p203, %p204
      %p207 = scmp.ne.s32.totalorder %s190, %s206
      %p208 = scmp.eq.s32.totalorder %s28, 0
      %p209 = por %p207, %p208
      %p210 = scmp.le.s32.totalorder 1, %s22
      %p211 = scmp.lt.s32.totalorder %s22, 3
      %p212 = pnand %p210, %p211
      %p213 = pneg %p212
      // Predicated region
      $region9: #{tpu_custom_call.1} parent=5 // pred_check
        _
      $region10: #{tpu_custom_call.1} parent=5 // pred_check_branch
        %215 = sbr.rel (%p212) target = $region12
      $region11: #{tpu_custom_call.1} parent=5 // pred_region
        %s216 = ssub.s32 %s22, 1
        // Predicated region
        $region13: #{tpu_custom_call.1} parent=11 // pred_check
          %p217 = pneg %p83
        $region14: #{tpu_custom_call.1} parent=11 // pred_check_branch
          %219 = sbr.rel (%p217) target = $region16
        $region15: #{tpu_custom_call.1} parent=11 // pred_region
          _
        $region16: #{tpu_custom_call.1} parent=11 // pred_fallthru
          _
        // Predicated region
        $region17: #{tpu_custom_call.1} parent=11 // pred_check
          %p220 = pneg %p104
        $region18: #{tpu_custom_call.1} parent=11 // pred_check_branch
          %222 = sbr.rel (%p220) target = $region20
        $region19: #{tpu_custom_call.1} parent=11 // pred_region
          _
        $region20: #{tpu_custom_call.1} parent=11 // pred_fallthru
          _
        // Predicated region
        $region21: #{tpu_custom_call.1} parent=11 // pred_check
          %p223 = pneg %p125
        $region22: #{tpu_custom_call.1} parent=11 // pred_check_branch
          %225 = sbr.rel (%p223) target = $region24
        $region23: #{tpu_custom_call.1} parent=11 // pred_region
          _
        $region24: #{tpu_custom_call.1} parent=11 // pred_fallthru
          _
        // Predicated region
        $region25: #{tpu_custom_call.1} parent=11 // pred_check
          %p226 = pneg %p146
        $region26: #{tpu_custom_call.1} parent=11 // pred_check_branch
          %228 = sbr.rel (%p226) target = $region28
        $region27: #{tpu_custom_call.1} parent=11 // pred_region
          _
        $region28: #{tpu_custom_call.1} parent=11 // pred_fallthru
          _
      $region12: #{tpu_custom_call.1} parent=5 // pred_fallthru
        _
      %p229 = scmp.lt.s32.totalorder %s22, 2
      // Predicated region
      $region29: #{tpu_custom_call.1} parent=5 // pred_check
        %p230 = pneg %p229
      $region30: #{tpu_custom_call.1} parent=5 // pred_check_branch
        %232 = sbr.rel (%p230) target = $region32
      $region31: #{tpu_custom_call.1} parent=5 // pred_region
        // Predicated region
        $region33: #{tpu_custom_call.1} parent=31 // pred_check
          %p233 = pneg %p56
        $region34: #{tpu_custom_call.1} parent=31 // pred_check_branch
          %235 = sbr.rel (%p233) target = $region36
        $region35: #{tpu_custom_call.1} parent=31 // pred_region
          %s236 = sand.u32 %s46, 1
          %s237 = scalar_lea.sflag [#allocation3], %s236
          %s238 = sand.u32 %s46, 1
          %s239 = smul.addr %s238, 8
          %s240 = scalar_lea.vmem [#allocation2], %s239
          %s242 = ssub.s32 128, 128
          %243 = vsyncadd %s237, %s242
          %s244 = smul.addr %s29, 4
          %s245 = sadd.s32 %s30, %s244
          %s246 = smul.addr %s245, 32
          %s247 = scalar_lea.hbm %s0, %s246
          %s248 = sshll.u32 %s240, 4
          %s249 = int_to_ptr.vmem [resolvable:$true] %s248
          %254 = dma.hbm_to_vmem [thread:$0]  %s247, 128, %s249, %s237, 32, 32, 2
        $region36: #{tpu_custom_call.1} parent=31 // pred_fallthru
          _
      $region32: #{tpu_custom_call.1} parent=5 // pred_fallthru
        _
      %p255 = scmp.le.s32.totalorder 1, %s22
      %p256 = scmp.lt.s32.totalorder %s22, 3
      %p257 = pnand %p255, %p256
      %p258 = pneg %p257
      // Predicated region
      $region37: #{tpu_custom_call.1} parent=5 // pred_check
        _
      $region38: #{tpu_custom_call.1} parent=5 // pred_check_branch
        %260 = sbr.rel (%p257) target = $region40
      $region39: #{tpu_custom_call.1} parent=5 // pred_region
        %s261 = ssub.s32 %s22, 1
        %s262 = sand.u32 %s49, 1
        %s263 = scalar_lea.sflag [#allocation3], %s262
        %s264 = sand.u32 %s49, 1
        %s265 = smul.addr %s264, 8
        %s266 = scalar_lea.vmem [#allocation2], %s265
        // Predicated region
        $region41: #{tpu_custom_call.1} parent=39 // pred_check
          %p267 = pneg %p62
        $region42: #{tpu_custom_call.1} parent=39 // pred_check_branch
          %269 = sbr.rel (%p267) target = $region44
        $region43: #{tpu_custom_call.1} parent=39 // pred_region
          %270 = dma.done %s263, 128
        $region44: #{tpu_custom_call.1} parent=39 // pred_fallthru
          _
        %s271 = sand.u32 %s49, 1
        %s272 = scalar_lea.sflag [#allocation3], %s271
        %s273 = sand.u32 %s49, 1
        %s274 = smul.addr %s273, 8
        %s275 = scalar_lea.vmem [#allocation2], %s274
        %p276 = pneg %p62
        %p277 = pneg %p59
        %p278 = pneg %p83
        %p279 = pneg %p80
        %p280 = pneg %p104
        %p281 = pneg %p101
        %p282 = pneg %p125
        %p283 = pneg %p122
        %p284 = pneg %p146
        %p285 = pneg %p143
        %p286 = pneg %p174
        %p287 = pneg %p171
        %s288 = sand.u32 %s161, 1
        %s289 = scalar_lea.sflag [#allocation4], %s288
        %s290 = sand.u32 %s161, 1
        %s291 = scalar_lea.vmem [#allocation5], %s290
        %p292 = pneg %p202
        %p293 = pneg %p199
        %s294 = sand.u32 %s189, 1
        %s295 = scalar_lea.sflag [#allocation7], %s294
        %s296 = sand.u32 %s189, 1
        %s297 = scalar_lea.vmem [#allocation6], %s296
        %v299 = vld [vmem:[%s1] sm:$0x3]
        %v300 = vpack.c.bf16 %v299, %v299
        %v301 = vld [vmem:[%s3] sm:$0x3]
        %v302 = vpack.c.bf16 %v301, %v301
        %v303 = vld [vmem:[%s266] sm:$0x3]
        %vm304 = vcmask 31744
        %v306 = vsel %vm304, %v300, 0
        %vm308 = vcmask 1041408
        %v310 = vsel %vm308, %v303, 0
        %312 = vmatprep.subr.bf16.mxu0 0
        %313 = vmatpush1.bf16.msra.mxu0 %v310
        %314 = vmatprep.subr.bf16.mxu0 0
        %315 = vmatpush1.bf16.msra.mxu0 0
        %316 = vmatprep.subr.bf16.mxu0 0
        %317 = vmatpush1.bf16.msra.mxu0 0
        %318 = vmatprep.subr.bf16.mxu0 0
        %319 = vmatpush1.bf16.msra.mxu0 0
        %320 = vmatprep.subr.bf16.mxu0 0
        %321 = vmatpush1.bf16.msra.mxu0 0
        %322 = vmatprep.subr.bf16.mxu0 0
        %323 = vmatpush1.bf16.msra.mxu0 0
        %324 = vmatprep.subr.bf16.mxu0 0
        %325 = vmatpush1.bf16.msra.mxu0 0
        %326 = vmatprep.subr.bf16.mxu0 0
        %327 = vmatpush1.bf16.msra.mxu0 0
        %328 = vmatprep.subr.bf16.mxu0 0
        %329 = vmatpush1.bf16.msra.mxu0 0
        %330 = vmatprep.subr.bf16.mxu0 0
        %331 = vmatpush1.bf16.msra.mxu0 0
        %332 = vmatprep.subr.bf16.mxu0 0
        %333 = vmatpush1.bf16.msra.mxu0 0
        %334 = vmatprep.subr.bf16.mxu0 0
        %335 = vmatpush1.bf16.msra.mxu0 0
        %336 = vmatprep.subr.bf16.mxu0 0
        %337 = vmatpush1.bf16.msra.mxu0 0
        %338 = vmatprep.subr.bf16.mxu0 0
        %339 = vmatpush1.bf16.msra.mxu0 0
        %340 = vmatprep.subr.bf16.mxu0 0
        %341 = vmatpush1.bf16.msra.mxu0 0
        %342 = vmatprep.subr.bf16.mxu0 0
        %343 = vmatpush1.bf16.msra.mxu0 0
        %344 = vmatprep.mubr.bf16.mxu0 0
        %345 = vmatmul.mubr.bf16.gmra.mrb[0].mxu0 %v306
        %v346 = vpop.f32.mrb[0].mxu0
        %v347 = vadd.f32 0.0, %v346
        %v348 = vpop.f32.mrb[0].mxu0
        %v349 = vpop.f32.mrb[0].mxu0
        %v350 = vpop.f32.mrb[0].mxu0
        %351 = vdwg.mxu0
        %v353 = vsel %vm304, %v302, 0
        %355 = vmatprep.subr.bf16.mxu0 0
        %356 = vmatpush1.bf16.msra.mxu0 %v310
        %357 = vmatprep.subr.bf16.mxu0 0
        %358 = vmatpush1.bf16.msra.mxu0 0
        %359 = vmatprep.subr.bf16.mxu0 0
        %360 = vmatpush1.bf16.msra.mxu0 0
        %361 = vmatprep.subr.bf16.mxu0 0
        %362 = vmatpush1.bf16.msra.mxu0 0
        %363 = vmatprep.subr.bf16.mxu0 0
        %364 = vmatpush1.bf16.msra.mxu0 0
        %365 = vmatprep.subr.bf16.mxu0 0
        %366 = vmatpush1.bf16.msra.mxu0 0
        %367 = vmatprep.subr.bf16.mxu0 0
        %368 = vmatpush1.bf16.msra.mxu0 0
        %369 = vmatprep.subr.bf16.mxu0 0
        %370 = vmatpush1.bf16.msra.mxu0 0
        %371 = vmatprep.subr.bf16.mxu0 0
        %372 = vmatpush1.bf16.msra.mxu0 0
        %373 = vmatprep.subr.bf16.mxu0 0
        %374 = vmatpush1.bf16.msra.mxu0 0
        %375 = vmatprep.subr.bf16.mxu0 0
        %376 = vmatpush1.bf16.msra.mxu0 0
        %377 = vmatprep.subr.bf16.mxu0 0
        %378 = vmatpush1.bf16.msra.mxu0 0
        %379 = vmatprep.subr.bf16.mxu0 0
        %380 = vmatpush1.bf16.msra.mxu0 0
        %381 = vmatprep.subr.bf16.mxu0 0
        %382 = vmatpush1.bf16.msra.mxu0 0
        %383 = vmatprep.subr.bf16.mxu0 0
        %384 = vmatpush1.bf16.msra.mxu0 0
        %385 = vmatprep.subr.bf16.mxu0 0
        %386 = vmatpush1.bf16.msra.mxu0 0
        %387 = vmatprep.mubr.bf16.mxu0 0
        %388 = vmatmul.mubr.bf16.gmra.mrb[0].mxu0 %v353
        %v389 = vpop.f32.mrb[0].mxu0
        %v390 = vadd.f32 0.0, %v389
        %v391 = vpop.f32.mrb[0].mxu0
        %v392 = vpop.f32.mrb[0].mxu0
        %v393 = vpop.f32.mrb[0].mxu0
        %394 = vdwg.mxu0
        %s395 = scalar_lea.vmem %s266, 2 [#allocation2]
        %v396 = vld [vmem:[%s395] sm:$0x3]
        %v398 = vsel %vm308, %v396, 0
        %400 = vmatprep.subr.bf16.mxu0 0
        %401 = vmatpush1.bf16.msra.mxu0 %v398
        %402 = vmatprep.subr.bf16.mxu0 0
        %403 = vmatpush1.bf16.msra.mxu0 0
        %404 = vmatprep.subr.bf16.mxu0 0
        %405 = vmatpush1.bf16.msra.mxu0 0
        %406 = vmatprep.subr.bf16.mxu0 0
        %407 = vmatpush1.bf16.msra.mxu0 0
        %408 = vmatprep.subr.bf16.mxu0 0
        %409 = vmatpush1.bf16.msra.mxu0 0
        %410 = vmatprep.subr.bf16.mxu0 0
        %411 = vmatpush1.bf16.msra.mxu0 0
        %412 = vmatprep.subr.bf16.mxu0 0
        %413 = vmatpush1.bf16.msra.mxu0 0
        %414 = vmatprep.subr.bf16.mxu0 0
        %415 = vmatpush1.bf16.msra.mxu0 0
        %416 = vmatprep.subr.bf16.mxu0 0
        %417 = vmatpush1.bf16.msra.mxu0 0
        %418 = vmatprep.subr.bf16.mxu0 0
        %419 = vmatpush1.bf16.msra.mxu0 0
        %420 = vmatprep.subr.bf16.mxu0 0
        %421 = vmatpush1.bf16.msra.mxu0 0
        %422 = vmatprep.subr.bf16.mxu0 0
        %423 = vmatpush1.bf16.msra.mxu0 0
        %424 = vmatprep.subr.bf16.mxu0 0
        %425 = vmatpush1.bf16.msra.mxu0 0
        %426 = vmatprep.subr.bf16.mxu0 0
        %427 = vmatpush1.bf16.msra.mxu0 0
        %428 = vmatprep.subr.bf16.mxu0 0
        %429 = vmatpush1.bf16.msra.mxu0 0
        %430 = vmatprep.subr.bf16.mxu0 0
        %431 = vmatpush1.bf16.msra.mxu0 0
        %432 = vmatprep.mubr.bf16.mxu0 0
        %433 = vmatmul.mubr.bf16.gmra.mrb[0].mxu0 %v306
        %v434 = vpop.f32.mrb[0].mxu0
        %v435 = vadd.f32 0.0, %v434
        %v436 = vpop.f32.mrb[0].mxu0
        %v437 = vpop.f32.mrb[0].mxu0
        %v438 = vpop.f32.mrb[0].mxu0
        %439 = vdwg.mxu0
        %440 = vmatprep.subr.bf16.mxu0 0
        %441 = vmatpush1.bf16.msra.mxu0 %v398
        %442 = vmatprep.subr.bf16.mxu0 0
        %443 = vmatpush1.bf16.msra.mxu0 0
        %444 = vmatprep.subr.bf16.mxu0 0
        %445 = vmatpush1.bf16.msra.mxu0 0
        %446 = vmatprep.subr.bf16.mxu0 0
        %447 = vmatpush1.bf16.msra.mxu0 0
        %448 = vmatprep.subr.bf16.mxu0 0
        %449 = vmatpush1.bf16.msra.mxu0 0
        %450 = vmatprep.subr.bf16.mxu0 0
        %451 = vmatpush1.bf16.msra.mxu0 0
        %452 = vmatprep.subr.bf16.mxu0 0
        %453 = vmatpush1.bf16.msra.mxu0 0
        %454 = vmatprep.subr.bf16.mxu0 0
        %455 = vmatpush1.bf16.msra.mxu0 0
        %456 = vmatprep.subr.bf16.mxu0 0
        %457 = vmatpush1.bf16.msra.mxu0 0
        %458 = vmatprep.subr.bf16.mxu0 0
        %459 = vmatpush1.bf16.msra.mxu0 0
        %460 = vmatprep.subr.bf16.mxu0 0
        %461 = vmatpush1.bf16.msra.mxu0 0
        %462 = vmatprep.subr.bf16.mxu0 0
        %463 = vmatpush1.bf16.msra.mxu0 0
        %464 = vmatprep.subr.bf16.mxu0 0
        %465 = vmatpush1.bf16.msra.mxu0 0
        %466 = vmatprep.subr.bf16.mxu0 0
        %467 = vmatpush1.bf16.msra.mxu0 0
        %468 = vmatprep.subr.bf16.mxu0 0
        %469 = vmatpush1.bf16.msra.mxu0 0
        %470 = vmatprep.subr.bf16.mxu0 0
        %471 = vmatpush1.bf16.msra.mxu0 0
        %472 = vmatprep.mubr.bf16.mxu0 0
        %473 = vmatmul.mubr.bf16.gmra.mrb[0].mxu0 %v353
        %v474 = vpop.f32.mrb[0].mxu0
        %v475 = vadd.f32 0.0, %v474
        %v476 = vpop.f32.mrb[0].mxu0
        %v477 = vpop.f32.mrb[0].mxu0
        %v478 = vpop.f32.mrb[0].mxu0
        %479 = vdwg.mxu0
        %v480 = vmax.f32 %v347, %v435
        %v481 = vmax.f32 %v390, %v475
        %s482 = scalar_lea.vmem %s266, 4 [#allocation2]
        %v483 = vld [vmem:[%s482] sm:$0x3]
        %v485 = vsel %vm308, %v483, 0
        %487 = vmatprep.subr.bf16.mxu0 0
        %488 = vmatpush1.bf16.msra.mxu0 %v485
        %489 = vmatprep.subr.bf16.mxu0 0
        %490 = vmatpush1.bf16.msra.mxu0 0
        %491 = vmatprep.subr.bf16.mxu0 0
        %492 = vmatpush1.bf16.msra.mxu0 0
        %493 = vmatprep.subr.bf16.mxu0 0
        %494 = vmatpush1.bf16.msra.mxu0 0
        %495 = vmatprep.subr.bf16.mxu0 0
        %496 = vmatpush1.bf16.msra.mxu0 0
        %497 = vmatprep.subr.bf16.mxu0 0
        %498 = vmatpush1.bf16.msra.mxu0 0
        %499 = vmatprep.subr.bf16.mxu0 0
        %500 = vmatpush1.bf16.msra.mxu0 0
        %501 = vmatprep.subr.bf16.mxu0 0
        %502 = vmatpush1.bf16.msra.mxu0 0
        %503 = vmatprep.subr.bf16.mxu0 0
        %504 = vmatpush1.bf16.msra.mxu0 0
        %505 = vmatprep.subr.bf16.mxu0 0
        %506 = vmatpush1.bf16.msra.mxu0 0
        %507 = vmatprep.subr.bf16.mxu0 0
        %508 = vmatpush1.bf16.msra.mxu0 0
        %509 = vmatprep.subr.bf16.mxu0 0
        %510 = vmatpush1.bf16.msra.mxu0 0
        %511 = vmatprep.subr.bf16.mxu0 0
        %512 = vmatpush1.bf16.msra.mxu0 0
        %513 = vmatprep.subr.bf16.mxu0 0
        %514 = vmatpush1.bf16.msra.mxu0 0
        %515 = vmatprep.subr.bf16.mxu0 0
        %516 = vmatpush1.bf16.msra.mxu0 0
        %517 = vmatprep.subr.bf16.mxu0 0
        %518 = vmatpush1.bf16.msra.mxu0 0
        %519 = vmatprep.mubr.bf16.mxu0 0
        %520 = vmatmul.mubr.bf16.gmra.mrb[0].mxu0 %v306
        %v521 = vpop.f32.mrb[0].mxu0
        %v522 = vadd.f32 0.0, %v521
        %v523 = vpop.f32.mrb[0].mxu0
        %v524 = vpop.f32.mrb[0].mxu0
        %v525 = vpop.f32.mrb[0].mxu0
        %526 = vdwg.mxu0
        %527 = vmatprep.subr.bf16.mxu0 0
        %528 = vmatpush1.bf16.msra.mxu0 %v485
        %529 = vmatprep.subr.bf16.mxu0 0
        %530 = vmatpush1.bf16.msra.mxu0 0
        %531 = vmatprep.subr.bf16.mxu0 0
        %532 = vmatpush1.bf16.msra.mxu0 0
        %533 = vmatprep.subr.bf16.mxu0 0
        %534 = vmatpush1.bf16.msra.mxu0 0
        %535 = vmatprep.subr.bf16.mxu0 0
        %536 = vmatpush1.bf16.msra.mxu0 0
        %537 = vmatprep.subr.bf16.mxu0 0
        %538 = vmatpush1.bf16.msra.mxu0 0
        %539 = vmatprep.subr.bf16.mxu0 0
        %540 = vmatpush1.bf16.msra.mxu0 0
        %541 = vmatprep.subr.bf16.mxu0 0
        %542 = vmatpush1.bf16.msra.mxu0 0
        %543 = vmatprep.subr.bf16.mxu0 0
        %544 = vmatpush1.bf16.msra.mxu0 0
        %545 = vmatprep.subr.bf16.mxu0 0
        %546 = vmatpush1.bf16.msra.mxu0 0
        %547 = vmatprep.subr.bf16.mxu0 0
        %548 = vmatpush1.bf16.msra.mxu0 0
        %549 = vmatprep.subr.bf16.mxu0 0
        %550 = vmatpush1.bf16.msra.mxu0 0
        %551 = vmatprep.subr.bf16.mxu0 0
        %552 = vmatpush1.bf16.msra.mxu0 0
        %553 = vmatprep.subr.bf16.mxu0 0
        %554 = vmatpush1.bf16.msra.mxu0 0
        %555 = vmatprep.subr.bf16.mxu0 0
        %556 = vmatpush1.bf16.msra.mxu0 0
        %557 = vmatprep.subr.bf16.mxu0 0
        %558 = vmatpush1.bf16.msra.mxu0 0
        %559 = vmatprep.mubr.bf16.mxu0 0
        %560 = vmatmul.mubr.bf16.gmra.mrb[0].mxu0 %v353
        %v561 = vpop.f32.mrb[0].mxu0
        %v562 = vadd.f32 0.0, %v561
        %v563 = vpop.f32.mrb[0].mxu0
        %v564 = vpop.f32.mrb[0].mxu0
        %v565 = vpop.f32.mrb[0].mxu0
        %566 = vdwg.mxu0
        %v567 = vmax.f32 %v480, %v522
        %v568 = vmax.f32 %v481, %v562
        %s569 = scalar_lea.vmem %s266, 6 [#allocation2]
        %v570 = vld [vmem:[%s569] sm:$0x3]
        %v572 = vsel %vm308, %v570, 0
        %574 = vmatprep.subr.bf16.mxu0 0
        %575 = vmatpush1.bf16.msra.mxu0 %v572
        %576 = vmatprep.subr.bf16.mxu0 0
        %577 = vmatpush1.bf16.msra.mxu0 0
        %578 = vmatprep.subr.bf16.mxu0 0
        %579 = vmatpush1.bf16.msra.mxu0 0
        %580 = vmatprep.subr.bf16.mxu0 0
        %581 = vmatpush1.bf16.msra.mxu0 0
        %582 = vmatprep.subr.bf16.mxu0 0
        %583 = vmatpush1.bf16.msra.mxu0 0
        %584 = vmatprep.subr.bf16.mxu0 0
        %585 = vmatpush1.bf16.msra.mxu0 0
        %586 = vmatprep.subr.bf16.mxu0 0
        %587 = vmatpush1.bf16.msra.mxu0 0
        %588 = vmatprep.subr.bf16.mxu0 0
        %589 = vmatpush1.bf16.msra.mxu0 0
        %590 = vmatprep.subr.bf16.mxu0 0
        %591 = vmatpush1.bf16.msra.mxu0 0
        %592 = vmatprep.subr.bf16.mxu0 0
        %593 = vmatpush1.bf16.msra.mxu0 0
        %594 = vmatprep.subr.bf16.mxu0 0
        %595 = vmatpush1.bf16.msra.mxu0 0
        %596 = vmatprep.subr.bf16.mxu0 0
        %597 = vmatpush1.bf16.msra.mxu0 0
        %598 = vmatprep.subr.bf16.mxu0 0
        %599 = vmatpush1.bf16.msra.mxu0 0
        %600 = vmatprep.subr.bf16.mxu0 0
        %601 = vmatpush1.bf16.msra.mxu0 0
        %602 = vmatprep.subr.bf16.mxu0 0
        %603 = vmatpush1.bf16.msra.mxu0 0
        %604 = vmatprep.subr.bf16.mxu0 0
        %605 = vmatpush1.bf16.msra.mxu0 0
        %606 = vmatprep.mubr.bf16.mxu0 0
        %607 = vmatmul.mubr.bf16.gmra.mrb[0].mxu0 %v306
        %v608 = vpop.f32.mrb[0].mxu0
        %v609 = vadd.f32 0.0, %v608
        %v610 = vpop.f32.mrb[0].mxu0
        %v611 = vpop.f32.mrb[0].mxu0
        %v612 = vpop.f32.mrb[0].mxu0
        %613 = vdwg.mxu0
        %614 = vmatprep.subr.bf16.mxu0 0
        %615 = vmatpush1.bf16.msra.mxu0 %v572
        %616 = vmatprep.subr.bf16.mxu0 0
        %617 = vmatpush1.bf16.msra.mxu0 0
        %618 = vmatprep.subr.bf16.mxu0 0
        %619 = vmatpush1.bf16.msra.mxu0 0
        %620 = vmatprep.subr.bf16.mxu0 0
        %621 = vmatpush1.bf16.msra.mxu0 0
        %622 = vmatprep.subr.bf16.mxu0 0
        %623 = vmatpush1.bf16.msra.mxu0 0
        %624 = vmatprep.subr.bf16.mxu0 0
        %625 = vmatpush1.bf16.msra.mxu0 0
        %626 = vmatprep.subr.bf16.mxu0 0
        %627 = vmatpush1.bf16.msra.mxu0 0
        %628 = vmatprep.subr.bf16.mxu0 0
        %629 = vmatpush1.bf16.msra.mxu0 0
        %630 = vmatprep.subr.bf16.mxu0 0
        %631 = vmatpush1.bf16.msra.mxu0 0
        %632 = vmatprep.subr.bf16.mxu0 0
        %633 = vmatpush1.bf16.msra.mxu0 0
        %634 = vmatprep.subr.bf16.mxu0 0
        %635 = vmatpush1.bf16.msra.mxu0 0
        %636 = vmatprep.subr.bf16.mxu0 0
        %637 = vmatpush1.bf16.msra.mxu0 0
        %638 = vmatprep.subr.bf16.mxu0 0
        %639 = vmatpush1.bf16.msra.mxu0 0
        %640 = vmatprep.subr.bf16.mxu0 0
        %641 = vmatpush1.bf16.msra.mxu0 0
        %642 = vmatprep.subr.bf16.mxu0 0
        %643 = vmatpush1.bf16.msra.mxu0 0
        %644 = vmatprep.subr.bf16.mxu0 0
        %645 = vmatpush1.bf16.msra.mxu0 0
        %646 = vmatprep.mubr.bf16.mxu0 0
        %647 = vmatmul.mubr.bf16.gmra.mrb[0].mxu0 %v353
        %v648 = vpop.f32.mrb[0].mxu0
        %v649 = vadd.f32 0.0, %v648
        %v650 = vpop.f32.mrb[0].mxu0
        %v651 = vpop.f32.mrb[0].mxu0
        %v652 = vpop.f32.mrb[0].mxu0
        %653 = vdwg.mxu0
        %v654 = vmax.f32 %v567, %v609
        %v655 = vmax.f32 %v568, %v649
        %v656 = vld [vmem:[%s2] sm:$0x3]
        %658 = vset.pattern.permute.xlu0 0
        %659 = vperm.xlu0 %658, %v656
        %v660 = vpop.permute.xlu0 %659
        %v662 = vadd.f32 %v654, %v660
        %v663 = vpack.c.bf16 %v662, %v662
        %vm664 = vcmask 516096
        %665 = vst.msk [vmem:[%s291] sm:$0x1] %vm664, %v663
        %v666 = vld [vmem:[%s4] sm:$0x3]
        %668 = vset.pattern.permute.xlu0 0
        %669 = vperm.xlu0 %668, %v666
        %v670 = vpop.permute.xlu0 %669
        %v672 = vadd.f32 %v655, %v670
        %v673 = vpack.c.bf16 %v672, %v672
        %674 = vst.msk [vmem:[%s297] sm:$0x1] %vm664, %v673
        %s675 = sand.u32 %s161, 1
        %s676 = scalar_lea.sflag [#allocation4], %s675
        %s677 = sand.u32 %s161, 1
        %s678 = scalar_lea.vmem [#allocation5], %s677
        %s679 = sand.u32 %s189, 1
        %s680 = scalar_lea.sflag [#allocation7], %s679
        %s681 = sand.u32 %s189, 1
        %s682 = scalar_lea.vmem [#allocation6], %s681
        // Predicated region
        $region45: #{tpu_custom_call.1} parent=39 // pred_check
          %p683 = pneg %p171
        $region46: #{tpu_custom_call.1} parent=39 // pred_check_branch
          %685 = sbr.rel (%p683) target = $region48
        $region47: #{tpu_custom_call.1} parent=39 // pred_region
          %s687 = ssub.s32 16, 16
          %688 = vsyncadd %s676, %s687
          %s689 = sadd.s32 %s32, %s31
          %s690 = smul.addr %s689, 16
          %s691 = scalar_lea.hbm %s5, %s690
          %s693 = sshll.u32 %s678, 4
          %s694 = int_to_ptr.vmem [resolvable:$true] %s693
          %696 = dma.vmem_to_hbm [thread:$0]  %s694, 16, %s691, %s676
        $region48: #{tpu_custom_call.1} parent=39 // pred_fallthru
          _
        // Predicated region
        $region49: #{tpu_custom_call.1} parent=39 // pred_check
          %p697 = pneg %p199
        $region50: #{tpu_custom_call.1} parent=39 // pred_check_branch
          %699 = sbr.rel (%p697) target = $region52
        $region51: #{tpu_custom_call.1} parent=39 // pred_region
          %s701 = ssub.s32 16, 16
          %702 = vsyncadd %s680, %s701
          %s703 = sadd.s32 %s32, %s31
          %s704 = smul.addr %s703, 16
          %s705 = scalar_lea.hbm %s6, %s704
          %s707 = sshll.u32 %s682, 4
          %s708 = int_to_ptr.vmem [resolvable:$true] %s707
          %710 = dma.vmem_to_hbm [thread:$0]  %s708, 16, %s705, %s680
        $region52: #{tpu_custom_call.1} parent=39 // pred_fallthru
          _
      $region40: #{tpu_custom_call.1} parent=5 // pred_fallthru
        _
      %p711 = scmp.le.s32.totalorder 2, %s22
      // Predicated region
      $region53: #{tpu_custom_call.1} parent=5 // pred_check
        %p712 = pneg %p711
      $region54: #{tpu_custom_call.1} parent=5 // pred_check_branch
        %714 = sbr.rel (%p712) target = $region56
      $region55: #{tpu_custom_call.1} parent=5 // pred_region
        %s715 = ssub.s32 %s22, 2
        // Predicated region
        $region57: #{tpu_custom_call.1} parent=55 // pred_check
          %p716 = pneg %p177
        $region58: #{tpu_custom_call.1} parent=55 // pred_check_branch
          %718 = sbr.rel (%p716) target = $region60
        $region59: #{tpu_custom_call.1} parent=55 // pred_region
          %s719 = sand.u32 %s162, 1
          %s720 = scalar_lea.sflag [#allocation4], %s719
          %s721 = sand.u32 %s162, 1
          %s722 = scalar_lea.vmem [#allocation5], %s721
          %723 = dma.done %s720, 16
        $region60: #{tpu_custom_call.1} parent=55 // pred_fallthru
          _
        // Predicated region
        $region61: #{tpu_custom_call.1} parent=55 // pred_check
          %p724 = pneg %p205
        $region62: #{tpu_custom_call.1} parent=55 // pred_check_branch
          %726 = sbr.rel (%p724) target = $region64
        $region63: #{tpu_custom_call.1} parent=55 // pred_region
          %s727 = sand.u32 %s190, 1
          %s728 = scalar_lea.sflag [#allocation7], %s727
          %s729 = sand.u32 %s190, 1
          %s730 = scalar_lea.vmem [#allocation6], %s729
          %731 = dma.done %s728, 16
        $region64: #{tpu_custom_call.1} parent=55 // pred_fallthru
          _
      $region56: #{tpu_custom_call.1} parent=5 // pred_fallthru
        _
    $region6: #{tpu_custom_call.1} parent=1 // loop_footer
      %s26 = sadd.s32 1, %s22
    $region7: #{tpu_custom_call.1} parent=1 // loop_footer_branch
      %21 = sbr.rel target = $region3
    $region8: #{tpu_custom_call.1} parent=1 // loop_exit
      _
    %732 = vsyncpa [#allocation3], 1
    %s733 = scalar_lea.sflag [#allocation3], 1
    %734 = vsyncpa %s733, 1
    %735 = vsyncpa [#allocation4], 1
    %s736 = scalar_lea.sflag [#allocation4], 1
    %737 = vsyncpa %s736, 1
    %738 = vsyncpa [#allocation7], 1
    %s739 = scalar_lea.sflag [#allocation7], 1
    %740 = vsyncpa %s739, 1

</llo_original>
